<compile_context>
chip_gen: v6e
topology: v6e:2x2x1
jax: 0.10.0
libtpu: 0.0.40
codegen_flags: <defaults>
</compile_context>

<pallas_src>
import numpy as np
import jax
import jax.numpy as jnp
from jax import lax
from jax.experimental import pallas as pl
from jax.experimental.pallas import tpu as pltpu

PHI = (1 + np.sqrt(5)) / 2
TAU = 2 * np.pi

_LANE = 128            # complex feature padding -> packed (real) dims multiple of 256
_BF16_SUBLANE = 16     # bf16 packs 16 rows per sublane tile
_MAX_BATCH_TILE = 256  # per-TC VMEM-safe on v7x (64 MiB) while keeping the MXU busy


def _round_up(n: int, m: int) -> int:
    return ((n + m - 1) // m) * m


def _matmul_kernel(x_ref, w_ref, o_ref):
    """One bf16 MXU matmul per batch tile; f32 accumulate + f32 store."""
    o_ref[...] = jnp.dot(x_ref[...], w_ref[...],
                         preferred_element_type=jnp.float32)


def _pack_right_mult_block(a_complex):
    """complex (K, N) right-multiplier A -> real (2K, 2N) block R such that
    [xr | xi] @ R = [yr | yi] with y = x @ A (exact ring embedding of C)."""
    ar = jnp.real(a_complex).astype(jnp.float32)
    ai = jnp.imag(a_complex).astype(jnp.float32)
    top = jnp.concatenate([ar, ai], axis=1)      # (K, 2N)
    bot = jnp.concatenate([-ai, ar], axis=1)     # (K, 2N)
    return jnp.concatenate([top, bot], axis=0)   # (2K, 2N)


def quantum_meta_layer_forward(x, weight, phase, meta_weights, meta_level=0):
    """x: complex64 (B, in); weight: complex64 (out, in); phase: complex64 (out,);
    meta_weights: complex64 (meta_depth, out, in). Returns complex64 (B, out)."""
    B, in_f = x.shape
    out_f = weight.shape[0]
    meta_depth = meta_weights.shape[0]
    n_meta = min(int(meta_level), meta_depth)

    assert B == out_f, "module semantics require batch == out_features (phase broadcast)"
    if n_meta > 0:
        assert in_f == out_f, "meta loop requires in_features == out_features"

    # --- wrapper-side exact algebraic folds (plain JAX; amortized / constant-
    # --- folded under jit when the module parameters are reused across steps) ---
    # (1) Fold the whole meta chain into one effective right-multiplier:
    #     PyTorch:  qs = (x @ W.T) * e ; qs <- qs @ (I + rot_i * M_i.T), i < n_meta
    #     =>        qs = (e * x) @ [ W.T @ prod_i (I + rot_i * M_i.T) ] = (e*x) @ A_eff
    a_eff = weight.astype(jnp.complex64).T                            # (in, out)
    for i in range(n_meta):
        rot = np.complex64(np.exp(1j * TAU * i / meta_depth))
        m_t = meta_weights[i].astype(jnp.complex64).T                 # (out, out)
        a_eff = a_eff + rot * jnp.matmul(a_eff, m_t,
                                         precision=lax.Precision.HIGHEST)

    # (2) Fold the exp(1j*phase[b]) row scale into x (a diagonal row scale
    #     commutes with the right-multiplication by A_eff).
    e = jnp.exp(1j * phase.astype(jnp.complex64))                     # (out,) == (B,)
    x_scaled = x.astype(jnp.complex64) * e[:, None]                   # (B, in)

    # (3) Zero-pad complex feature dims to multiples of 128 (packed K/N multiples
    #     of 256 -> MXU aligned, lane-dense output) and the batch to the tile.
    in_p = _round_up(in_f, _LANE)
    out_p = _round_up(out_f, _LANE)
    tb = min(_round_up(B, _BF16_SUBLANE), _MAX_BATCH_TILE)
    b_pad = _round_up(B, tb)
    grid = (b_pad // tb,)

    x_pad = jnp.zeros((b_pad, in_p), jnp.complex64).at[:B, :in_f].set(x_scaled)
    a_pad = jnp.zeros((in_p, out_p), jnp.complex64).at[:in_f, :out_f].set(a_eff)

    # (4) Pack complex -> real block form; cast MXU operands to bf16 (f32 accum).
    x_packed = jnp.concatenate([jnp.real(x_pad), jnp.imag(x_pad)],
                               axis=1).astype(jnp.bfloat16)           # (b_pad, 2*in_p)
    w_block = _pack_right_mult_block(a_pad).astype(jnp.bfloat16)      # (2*in_p, 2*out_p)

    kk, nn = 2 * in_p, 2 * out_p

    # Explicit scoped-VMEM budget (defaults are only 16 MiB v5e / 32 MiB v6e+).
    need = (tb * kk * 2 * 2) + (kk * nn * 2 * 2) + (tb * nn * 4 * 2)
    vmem_limit = int(min(64 << 20, max(32 << 20, int(need * 1.5))))

    x_spec = pl.BlockSpec((tb, kk), lambda i: (i, 0))
    out_spec = pl.BlockSpec((tb, nn), lambda i: (i, 0))
    params = pltpu.CompilerParams(dimension_semantics=("parallel",),
                                  vmem_limit_bytes=vmem_limit)

    def run(w_spec):
        return pl.pallas_call(
            _matmul_kernel,
            out_shape=jax.ShapeDtypeStruct((b_pad, nn), jnp.float32),
            grid=grid,
            in_specs=[x_spec, w_spec],
            out_specs=out_spec,
            compiler_params=params,
        )(x_packed, w_block)

    # The weight block is grid-invariant (index_map always (0, 0)): single-buffer
    # it to halve its VMEM footprint. Fall back to the default double-buffered
    # spec on jax versions without pipeline_mode / Buffered.
    try:
        out_packed = run(pl.BlockSpec((kk, nn), lambda i: (0, 0),
                                      pipeline_mode=pl.Buffered(1)))
    except Exception:  # API/backend fallback only; kernel itself is unchanged.
        out_packed = run(pl.BlockSpec((kk, nn), lambda i: (0, 0)))

    # TODO(synk): downstream Pallas consumers should take the packed real
    # [yr | yi] layout directly to avoid this extra complex-interleave pass.
    return lax.complex(out_packed[:B, :out_f],
                       out_packed[:B, out_p:out_p + out_f])


def _reference(x, weight, phase, meta_weights, meta_level, meta_depth):
    """Plain numpy complex128 reference mirroring the PyTorch forward."""
    x = np.asarray(x).astype(np.complex128)
    weight = np.asarray(weight).astype(np.complex128)
    phase = np.asarray(phase).astype(np.complex128)
    meta_weights = np.asarray(meta_weights).astype(np.complex128)
    qs = (x @ weight.T) * np.exp(1j * phase)[:, None]
    for i in range(min(meta_level, meta_depth)):
        mt = qs @ meta_weights[i].T
        qs = qs + mt * np.exp(1j * TAU * i / meta_depth)
    return qs


def _cplx_randn(key, shape, scale=0.5):
    kr, ki = jax.random.split(key)
    return (jax.random.normal(kr, shape, dtype=jnp.float32) * scale
            + 1j * jax.random.normal(ki, shape, dtype=jnp.float32) * scale
            ).astype(jnp.complex64)


if __name__ == "__main__":
    # Shapes: in == out (required by the meta loop) and B == out (required by the
    # module's phase broadcast).
    in_features = 16
    out_features = 16
    batch = 16
    meta_depth = 3
    meta_level = 2

    key = jax.random.PRNGKey(0)
    k_x, k_w, k_p, k_m = jax.random.split(key, 4)

    # Deterministic synthetic parameters (same shapes/dtypes as the module).
    # TODO(synk): initialize_quantum_parameters' SVD orthogonalization is an
    #             init-time detail only; forward semantics are unaffected.
    x = _cplx_randn(k_x, (batch, in_features), scale=1.0)
    weight = _cplx_randn(k_w, (out_features, in_features))
    phase = _cplx_randn(k_p, (out_features,))
    meta_weights = _cplx_randn(k_m, (meta_depth, out_features, in_features))

    out = quantum_meta_layer_forward(x, weight, phase, meta_weights, meta_level)
    out = jax.block_until_ready(out)

    ref = _reference(x, weight, phase, meta_weights, meta_level, meta_depth)
    assert out.shape == (batch, out_features) and out.dtype == jnp.complex64
    # bf16 MXU operands (f32 accumulation): use a scale-aware absolute tolerance.
    atol = max(2e-2, 2e-2 * float(np.abs(ref).max()))
    np.testing.assert_allclose(np.asarray(out), ref.astype(np.complex64),
                               rtol=2e-2, atol=atol)

    # Also exercise the meta_level == 0 path (no meta fold).
    out0 = quantum_meta_layer_forward(x, weight, phase, meta_weights, 0)
    out0 = jax.block_until_ready(out0)
    ref0 = _reference(x, weight, phase, meta_weights, 0, meta_depth)
    atol0 = max(2e-2, 2e-2 * float(np.abs(ref0).max()))
    np.testing.assert_allclose(np.asarray(out0), ref0.astype(np.complex64),
                               rtol=2e-2, atol=atol0)

    print("KERNEL_OK")
</pallas_src>

<mosaic_0001>
module attributes {stable_mosaic.version = 11 : i64} {
  func.func @_matmul_kernel(%arg0: i32, %arg1: memref<16x256xbf16, #tpu.memory_space<vmem>>, %arg2: memref<256x256xbf16, #tpu.memory_space<vmem>>, %arg3: memref<16x256xf32, #tpu.memory_space<vmem>>) attributes {dimension_semantics = [#tpu.dimension_semantics<parallel>], iteration_bounds = array<i64: 1>, scalar_prefetch = 0 : i64, scratch_operands = 0 : i64, tpu.core_type = #tpu.core_type<tc>, window_params = [{transform_indices = @transform_0, window_bounds = array<i64: 16, 256>}, {pipeline_mode = #tpu.pipeline_mode<synchronous>, transform_indices = @transform_1, window_bounds = array<i64: 256, 256>}, {transform_indices = @transform_2, window_bounds = array<i64: 16, 256>}]} {
    %c0 = arith.constant 0 : index
    %c0_0 = arith.constant 0 : index
    %0 = vector.load %arg1[%c0, %c0_0] : memref<16x256xbf16, #tpu.memory_space<vmem>>, vector<16x256xbf16>
    %c0_1 = arith.constant 0 : index
    %c0_2 = arith.constant 0 : index
    %1 = vector.load %arg2[%c0_1, %c0_2] : memref<256x256xbf16, #tpu.memory_space<vmem>>, vector<256x256xbf16>
    %cst = arith.constant dense<0.000000e+00> : vector<16x256xf32>
    %2 = tpu.matmul %0, %1, %cst {dimension_numbers = #tpu.dot_dimension_numbers<[1], [0], [0], [1], [0, 0, 1, 1], [], []>} : vector<16x256xbf16>, vector<256x256xbf16>, vector<16x256xf32> -> vector<16x256xf32>
    %c0_3 = arith.constant 0 : index
    %c0_4 = arith.constant 0 : index
    %3 = vector.load %arg3[%c0_3, %c0_4] : memref<16x256xf32, #tpu.memory_space<vmem>>, vector<16x256xf32>
    tpu.vector_store %arg3[%c0_3, %c0_4], %2 {strides = array<i32>} : memref<16x256xf32, #tpu.memory_space<vmem>>, vector<16x256xf32>,
    return
  }
  func.func @transform_0(%arg0: i32) -> (i32, i32) {
    %c0_i32 = arith.constant 0 : i32
    %c0_i32_0 = arith.constant 0 : i32
    return %arg0, %c0_i32 : i32, i32
  }
  func.func @transform_1(%arg0: i32) -> (i32, i32) {
    %c0_i32 = arith.constant 0 : i32
    %c0_i32_0 = arith.constant 0 : i32
    %c0_i32_1 = arith.constant 0 : i32
    return %c0_i32, %c0_i32_0 : i32, i32
  }
  func.func @transform_2(%arg0: i32) -> (i32, i32) {
    %c0_i32 = arith.constant 0 : i32
    %c0_i32_0 = arith.constant 0 : i32
    return %arg0, %c0_i32 : i32, i32
  }
}

module attributes {stable_mosaic.version = 11 : i64} {
  func.func @_matmul_kernel(%arg0: i32, %arg1: memref<16x256xbf16, #tpu.memory_space<vmem>>, %arg2: memref<256x256xbf16, #tpu.memory_space<vmem>>, %arg3: memref<16x256xf32, #tpu.memory_space<vmem>>) attributes {dimension_semantics = [#tpu.dimension_semantics<parallel>], iteration_bounds = array<i64: 1>, scalar_prefetch = 0 : i64, scratch_operands = 0 : i64, tpu.core_type = #tpu.core_type<tc>, window_params = [{transform_indices = @transform_0, window_bounds = array<i64: 16, 256>}, {pipeline_mode = #tpu.pipeline_mode<synchronous>, transform_indices = @transform_1, window_bounds = array<i64: 256, 256>}, {transform_indices = @transform_2, window_bounds = array<i64: 16, 256>}]} {
    %c0 = arith.constant 0 : index
    %c0_0 = arith.constant 0 : index
    %0 = vector.load %arg1[%c0, %c0_0] : memref<16x256xbf16, #tpu.memory_space<vmem>>, vector<16x256xbf16>
    %c0_1 = arith.constant 0 : index
    %c0_2 = arith.constant 0 : index
    %1 = vector.load %arg2[%c0_1, %c0_2] : memref<256x256xbf16, #tpu.memory_space<vmem>>, vector<256x256xbf16>
    %cst = arith.constant dense<0.000000e+00> : vector<16x256xf32>
    %2 = tpu.matmul %0, %1, %cst {dimension_numbers = #tpu.dot_dimension_numbers<[1], [0], [0], [1], [0, 0, 1, 1], [], []>} : vector<16x256xbf16>, vector<256x256xbf16>, vector<16x256xf32> -> vector<16x256xf32>
    %c0_3 = arith.constant 0 : index
    %c0_4 = arith.constant 0 : index
    %3 = vector.load %arg3[%c0_3, %c0_4] : memref<16x256xf32, #tpu.memory_space<vmem>>, vector<16x256xf32>
    tpu.vector_store %arg3[%c0_3, %c0_4], %2 {strides = array<i32>} : memref<16x256xf32, #tpu.memory_space<vmem>>, vector<16x256xf32>,
    return
  }
  func.func @transform_0(%arg0: i32) -> (i32, i32) {
    %c0_i32 = arith.constant 0 : i32
    %c0_i32_0 = arith.constant 0 : i32
    return %arg0, %c0_i32 : i32, i32
  }
  func.func @transform_1(%arg0: i32) -> (i32, i32) {
    %c0_i32 = arith.constant 0 : i32
    %c0_i32_0 = arith.constant 0 : i32
    %c0_i32_1 = arith.constant 0 : i32
    return %c0_i32, %c0_i32_0 : i32, i32
  }
  func.func @transform_2(%arg0: i32) -> (i32, i32) {
    %c0_i32 = arith.constant 0 : i32
    %c0_i32_0 = arith.constant 0 : i32
    return %arg0, %c0_i32 : i32, i32
  }
}

</mosaic_0001>

<llo_original>
// kernel: tpu_custom_call.1
$region0: #{tpu_custom_call.1}
  #allocation0 [shape = 'u32[]', space=smem, size = 0x4, offset = 0x4, fixed_abs, tag = 'smem constant byte address 0x4 - core index']
  #allocation1 [shape = 'u32[144,128]{1,0:T(1,128)}', space=vmem, size = 0x12000, scoped, tag = 'internal scratch']
  %s0 = inlined_call_operand.hbm [shape: bf16[16,256], index: 0, kind: input, shape index: {}]
  %s1 = inlined_call_operand.hbm [shape: bf16[256,256], index: 1, kind: input, shape index: {}]
  %s2 = inlined_call_operand.hbm [shape: f32[16,256], index: 2, kind: output, shape index: {}]
  %s3 = sld [smem:[#allocation0]]
  $region26: #{tpu_custom_call.1} parent=0
    _
  %s5 = ssub.s32 1, %s3
  %s6 = scalar_select 0, %s5, %s3
  $region1: #{tpu_custom_call.1} parent=0
    #allocation2 [shape = 'u8[8192]{0}', space=vmem, size = 0x2000, scoped, tag = 'input window, operand 0, single buffered']
    #allocation3 [shape = 's32[1]{0}', space=sflag, size = 0x4, scoped, tag = 'scoped memory for tpu_custom_call.1']
    #allocation4 [shape = 's32[1]{0}', space=sflag, size = 0x4, scoped, tag = 'scoped memory for tpu_custom_call.1']
    #allocation5 [shape = 'u8[131072]{0}', space=vmem, size = 0x20000, scoped, tag = 'input window, operand 1, single buffered']
    #allocation6 [shape = 's32[1]{0}', space=sflag, size = 0x4, scoped, tag = 'scoped memory for tpu_custom_call.1']
    #allocation7 [shape = 'u8[16384]{0}', space=vmem, size = 0x4000, scoped, tag = 'output window, operand 0, single buffered']
    %7 = vsyncpa [#allocation3], 0
    %8 = vsyncpa [#allocation6], 0
    %9 = vsyncpa [#allocation4], 0
    // Predicated region
    $region2: #{tpu_custom_call.1} parent=1 // pred_check
      _
    $region3: #{tpu_custom_call.1} parent=1 // pred_check_branch
      %11 = sbr.rel (0) target = $region5
    $region4: #{tpu_custom_call.1} parent=1 // pred_region
      %s13 = ssub.s32 256, 256
      %14 = vsyncadd [#allocation3], %s13
      %s15 = sshll.u32 [#allocation2], 4
      %s16 = int_to_ptr.vmem [resolvable:$true] %s15
      %21 = dma.hbm_to_vmem [thread:$0]  %s0, 256, %s16, [#allocation3], 128, 128, 8
    $region5: #{tpu_custom_call.1} parent=1 // pred_fallthru
      _
    // Predicated region
    $region6: #{tpu_custom_call.1} parent=1 // pred_check
      _
    $region7: #{tpu_custom_call.1} parent=1 // pred_check_branch
      %23 = sbr.rel (0) target = $region9
    $region8: #{tpu_custom_call.1} parent=1 // pred_region
      %s25 = ssub.s32 4096, 4096
      %26 = vsyncadd [#allocation6], %s25
      %s27 = sshll.u32 [#allocation5], 4
      %s28 = int_to_ptr.vmem [resolvable:$true] %s27
      %33 = dma.hbm_to_vmem [thread:$0]  %s1, 4096, %s28, [#allocation6], 128, 128, 8
    $region9: #{tpu_custom_call.1} parent=1 // pred_fallthru
      _
    // Predicated region
    $region10: #{tpu_custom_call.1} parent=1 // pred_check
      _
    $region11: #{tpu_custom_call.1} parent=1 // pred_check_branch
      %35 = sbr.rel (0) target = $region13
    $region12: #{tpu_custom_call.1} parent=1 // pred_region
      %36 = dma.done [#allocation3], 256
    $region13: #{tpu_custom_call.1} parent=1 // pred_fallthru
      _
    // Predicated region
    $region14: #{tpu_custom_call.1} parent=1 // pred_check
      _
    $region15: #{tpu_custom_call.1} parent=1 // pred_check_branch
      %38 = sbr.rel (0) target = $region17
    $region16: #{tpu_custom_call.1} parent=1 // pred_region
      %39 = dma.done [#allocation6], 4096
    $region17: #{tpu_custom_call.1} parent=1 // pred_fallthru
      _
    %v40 = vld [vmem:[#allocation2] sm:$0xff]
    %v41 = vld [vmem:[#allocation2 + $0x8] sm:$0xff]
    %v42 = vld [vmem:[#allocation5] sm:$0xff]
    %v43 = vld [vmem:[#allocation5 + $0x8] sm:$0xff]
    %v44 = vld [vmem:[#allocation5 + $0x10] sm:$0xff]
    %v45 = vld [vmem:[#allocation5 + $0x18] sm:$0xff]
    %v46 = vld [vmem:[#allocation5 + $0x20] sm:$0xff]
    %v47 = vld [vmem:[#allocation5 + $0x28] sm:$0xff]
    %v48 = vld [vmem:[#allocation5 + $0x30] sm:$0xff]
    %v49 = vld [vmem:[#allocation5 + $0x38] sm:$0xff]
    %v50 = vld [vmem:[#allocation5 + $0x40] sm:$0xff]
    %v51 = vld [vmem:[#allocation5 + $0x48] sm:$0xff]
    %v52 = vld [vmem:[#allocation5 + $0x50] sm:$0xff]
    %v53 = vld [vmem:[#allocation5 + $0x58] sm:$0xff]
    %v54 = vld [vmem:[#allocation5 + $0x60] sm:$0xff]
    %v55 = vld [vmem:[#allocation5 + $0x68] sm:$0xff]
    %v56 = vld [vmem:[#allocation5 + $0x70] sm:$0xff]
    %v57 = vld [vmem:[#allocation5 + $0x78] sm:$0xff]
    %v58 = vld [vmem:[#allocation5 + $0x80] sm:$0xff]
    %v59 = vld [vmem:[#allocation5 + $0x88] sm:$0xff]
    %v60 = vld [vmem:[#allocation5 + $0x90] sm:$0xff]
    %v61 = vld [vmem:[#allocation5 + $0x98] sm:$0xff]
    %v62 = vld [vmem:[#allocation5 + $0xa0] sm:$0xff]
    %v63 = vld [vmem:[#allocation5 + $0xa8] sm:$0xff]
    %v64 = vld [vmem:[#allocation5 + $0xb0] sm:$0xff]
    %v65 = vld [vmem:[#allocation5 + $0xb8] sm:$0xff]
    %v66 = vld [vmem:[#allocation5 + $0xc0] sm:$0xff]
    %v67 = vld [vmem:[#allocation5 + $0xc8] sm:$0xff]
    %v68 = vld [vmem:[#allocation5 + $0xd0] sm:$0xff]
    %v69 = vld [vmem:[#allocation5 + $0xd8] sm:$0xff]
    %v70 = vld [vmem:[#allocation5 + $0xe0] sm:$0xff]
    %v71 = vld [vmem:[#allocation5 + $0xe8] sm:$0xff]
    %v72 = vld [vmem:[#allocation5 + $0xf0] sm:$0xff]
    %v73 = vld [vmem:[#allocation5 + $0xf8] sm:$0xff]
    %v76 = vunpack.c.l.b16 %v40
    %v77 = vunpack.c.h.b16 %v40
    %v78 = vunpack.c.l.b16 %v41
    %v79 = vunpack.c.h.b16 %v41
    %v80 = vpack.c.b16 %v78, %v76
    %v81 = vpack.c.b16 %v79, %v77
    %v116 = vunpack.c.l.b16 %v42
    %v117 = vunpack.c.h.b16 %v42
    %v118 = vunpack.c.l.b16 %v43
    %v119 = vunpack.c.h.b16 %v43
    %v120 = vunpack.c.l.b16 %v44
    %v121 = vunpack.c.h.b16 %v44
    %v122 = vunpack.c.l.b16 %v45
    %v123 = vunpack.c.h.b16 %v45
    %v124 = vunpack.c.l.b16 %v46
    %v125 = vunpack.c.h.b16 %v46
    %v126 = vunpack.c.l.b16 %v47
    %v127 = vunpack.c.h.b16 %v47
    %v128 = vunpack.c.l.b16 %v48
    %v129 = vunpack.c.h.b16 %v48
    %v130 = vunpack.c.l.b16 %v49
    %v131 = vunpack.c.h.b16 %v49
    %v132 = vunpack.c.l.b16 %v50
    %v133 = vunpack.c.h.b16 %v50
    %v134 = vunpack.c.l.b16 %v51
    %v135 = vunpack.c.h.b16 %v51
    %v136 = vunpack.c.l.b16 %v52
    %v137 = vunpack.c.h.b16 %v52
    %v138 = vunpack.c.l.b16 %v53
    %v139 = vunpack.c.h.b16 %v53
    %v140 = vunpack.c.l.b16 %v54
    %v141 = vunpack.c.h.b16 %v54
    %v142 = vunpack.c.l.b16 %v55
    %v143 = vunpack.c.h.b16 %v55
    %v144 = vunpack.c.l.b16 %v56
    %v145 = vunpack.c.h.b16 %v56
    %v146 = vunpack.c.l.b16 %v57
    %v147 = vunpack.c.h.b16 %v57
    %v148 = vunpack.c.l.b16 %v58
    %v149 = vunpack.c.h.b16 %v58
    %v150 = vunpack.c.l.b16 %v59
    %v151 = vunpack.c.h.b16 %v59
    %v152 = vunpack.c.l.b16 %v60
    %v153 = vunpack.c.h.b16 %v60
    %v154 = vunpack.c.l.b16 %v61
    %v155 = vunpack.c.h.b16 %v61
    %v156 = vunpack.c.l.b16 %v62
    %v157 = vunpack.c.h.b16 %v62
    %v158 = vunpack.c.l.b16 %v63
    %v159 = vunpack.c.h.b16 %v63
    %v160 = vunpack.c.l.b16 %v64
    %v161 = vunpack.c.h.b16 %v64
    %v162 = vunpack.c.l.b16 %v65
    %v163 = vunpack.c.h.b16 %v65
    %v164 = vunpack.c.l.b16 %v66
    %v165 = vunpack.c.h.b16 %v66
    %v166 = vunpack.c.l.b16 %v67
    %v167 = vunpack.c.h.b16 %v67
    %v168 = vunpack.c.l.b16 %v68
    %v169 = vunpack.c.h.b16 %v68
    %v170 = vunpack.c.l.b16 %v69
    %v171 = vunpack.c.h.b16 %v69
    %v172 = vunpack.c.l.b16 %v70
    %v173 = vunpack.c.h.b16 %v70
    %v174 = vunpack.c.l.b16 %v71
    %v175 = vunpack.c.h.b16 %v71
    %v176 = vunpack.c.l.b16 %v72
    %v177 = vunpack.c.h.b16 %v72
    %v178 = vunpack.c.l.b16 %v73
    %v179 = vunpack.c.h.b16 %v73
    %v180 = vpack.c.b16 %v118, %v116
    %v181 = vpack.c.b16 %v119, %v117
    %v182 = vpack.c.b16 %v122, %v120
    %v183 = vpack.c.b16 %v123, %v121
    %v184 = vpack.c.b16 %v126, %v124
    %v185 = vpack.c.b16 %v127, %v125
    %v186 = vpack.c.b16 %v130, %v128
    %v187 = vpack.c.b16 %v131, %v129
    %v188 = vpack.c.b16 %v134, %v132
    %v189 = vpack.c.b16 %v135, %v133
    %v190 = vpack.c.b16 %v138, %v136
    %v191 = vpack.c.b16 %v139, %v137
    %v192 = vpack.c.b16 %v142, %v140
    %v193 = vpack.c.b16 %v143, %v141
    %v194 = vpack.c.b16 %v146, %v144
    %v195 = vpack.c.b16 %v147, %v145
    %v196 = vpack.c.b16 %v150, %v148
    %v197 = vpack.c.b16 %v151, %v149
    %v198 = vpack.c.b16 %v154, %v152
    %v199 = vpack.c.b16 %v155, %v153
    %v200 = vpack.c.b16 %v158, %v156
    %v201 = vpack.c.b16 %v159, %v157
    %v202 = vpack.c.b16 %v162, %v160
    %v203 = vpack.c.b16 %v163, %v161
    %v204 = vpack.c.b16 %v166, %v164
    %v205 = vpack.c.b16 %v167, %v165
    %v206 = vpack.c.b16 %v170, %v168
    %v207 = vpack.c.b16 %v171, %v169
    %v208 = vpack.c.b16 %v174, %v172
    %v209 = vpack.c.b16 %v175, %v173
    %v210 = vpack.c.b16 %v178, %v176
    %v211 = vpack.c.b16 %v179, %v177
    %244 = vmatprep.subr.bf16.mxu0 %v195
    %245 = vmatpush1.bf16.msra.mxu0 %v194
    %246 = vmatprep.subr.bf16.mxu0 %v193
    %247 = vmatpush1.bf16.msra.mxu0 %v192
    %248 = vmatprep.subr.bf16.mxu0 %v191
    %249 = vmatpush1.bf16.msra.mxu0 %v190
    %250 = vmatprep.subr.bf16.mxu0 %v189
    %251 = vmatpush1.bf16.msra.mxu0 %v188
    %252 = vmatprep.subr.bf16.mxu0 %v187
    %253 = vmatpush1.bf16.msra.mxu0 %v186
    %254 = vmatprep.subr.bf16.mxu0 %v185
    %255 = vmatpush1.bf16.msra.mxu0 %v184
    %256 = vmatprep.subr.bf16.mxu0 %v183
    %257 = vmatpush1.bf16.msra.mxu0 %v182
    %258 = vmatprep.subr.bf16.mxu0 %v181
    %259 = vmatpush1.bf16.msra.mxu0 %v180
    %260 = vmatprep.subr.bf16.mxu0 %v211
    %261 = vmatpush2.bf16.msra.mxu0 %v210
    %262 = vmatprep.subr.bf16.mxu0 %v209
    %263 = vmatpush2.bf16.msra.mxu0 %v208
    %264 = vmatprep.subr.bf16.mxu0 %v207
    %265 = vmatpush2.bf16.msra.mxu0 %v206
    %266 = vmatprep.subr.bf16.mxu0 %v205
    %267 = vmatpush2.bf16.msra.mxu0 %v204
    %268 = vmatprep.subr.bf16.mxu0 %v203
    %269 = vmatpush2.bf16.msra.mxu0 %v202
    %270 = vmatprep.subr.bf16.mxu0 %v201
    %271 = vmatpush2.bf16.msra.mxu0 %v200
    %272 = vmatprep.subr.bf16.mxu0 %v199
    %273 = vmatpush2.bf16.msra.mxu0 %v198
    %274 = vmatprep.subr.bf16.mxu0 %v197
    %275 = vmatpush2.bf16.msra.mxu0 %v196
    %276 = vmatprep.mubr.bf16.mxu0 %v81
    %277 = vmatmul.mubr.bf16.gmra.mxu0 %v80
    %v278 = vpop.f32.mrf.mxu0
    %v279 = vadd.f32 0.0, %v278
    %v280 = vpop.f32.mrf.mxu0
    %v281 = vadd.f32 0.0, %v280
    %v282 = vpop.f32.mrf.mxu0
    %v283 = vadd.f32 0.0, %v282
    %v284 = vpop.f32.mrf.mxu0
    %v285 = vadd.f32 0.0, %v284
    %286 = vdwg.mxu0
    %287 = vst [vmem:[#allocation7] sm:$0xff] %v279
    %288 = vst [vmem:[#allocation7 + $0x8] sm:$0xff] %v281
    %289 = vst [vmem:[#allocation7 + $0x10] sm:$0xff] %v283
    %290 = vst [vmem:[#allocation7 + $0x18] sm:$0xff] %v285
    // Predicated region
    $region18: #{tpu_custom_call.1} parent=1 // pred_check
      _
    $region19: #{tpu_custom_call.1} parent=1 // pred_check_branch
      %292 = sbr.rel (0) target = $region21
    $region20: #{tpu_custom_call.1} parent=1 // pred_region
      %s294 = ssub.s32 512, 512
      %295 = vsyncadd [#allocation4], %s294
      %s296 = sshll.u32 [#allocation7], 4
      %s297 = int_to_ptr.vmem [resolvable:$true] %s296
      %302 = dma.vmem_to_hbm [thread:$0]  %s297, 512, %s2, [#allocation4], 256, 256, 16
    $region21: #{tpu_custom_call.1} parent=1 // pred_fallthru
      _
    // Predicated region
    $region22: #{tpu_custom_call.1} parent=1 // pred_check
      _
    $region23: #{tpu_custom_call.1} parent=1 // pred_check_branch
      %304 = sbr.rel (0) target = $region25
    $region24: #{tpu_custom_call.1} parent=1 // pred_region
      %305 = dma.done [#allocation4], 512
    $region25: #{tpu_custom_call.1} parent=1 // pred_fallthru
      _
    %306 = vsyncpa [#allocation3], 1
    %307 = vsyncpa [#allocation6], 1
    %308 = vsyncpa [#allocation4], 1

// kernel: tpu_custom_call.1
$region0: #{tpu_custom_call.1}
  #allocation0 [shape = 'u32[]', space=smem, size = 0x4, offset = 0x4, fixed_abs, tag = 'smem constant byte address 0x4 - core index']
  #allocation1 [shape = 'u32[144,128]{1,0:T(1,128)}', space=vmem, size = 0x12000, scoped, tag = 'internal scratch']
  %s0 = inlined_call_operand.hbm [shape: bf16[16,256], index: 0, kind: input, shape index: {}]
  %s1 = inlined_call_operand.hbm [shape: bf16[256,256], index: 1, kind: input, shape index: {}]
  %s2 = inlined_call_operand.hbm [shape: f32[16,256], index: 2, kind: output, shape index: {}]
  %s3 = sld [smem:[#allocation0]]
  $region26: #{tpu_custom_call.1} parent=0
    _
  %s5 = ssub.s32 1, %s3
  %s6 = scalar_select 0, %s5, %s3
  $region1: #{tpu_custom_call.1} parent=0
    #allocation2 [shape = 'u8[8192]{0}', space=vmem, size = 0x2000, scoped, tag = 'input window, operand 0, single buffered']
    #allocation3 [shape = 's32[1]{0}', space=sflag, size = 0x4, scoped, tag = 'scoped memory for tpu_custom_call.1']
    #allocation4 [shape = 's32[1]{0}', space=sflag, size = 0x4, scoped, tag = 'scoped memory for tpu_custom_call.1']
    #allocation5 [shape = 'u8[131072]{0}', space=vmem, size = 0x20000, scoped, tag = 'input window, operand 1, single buffered']
    #allocation6 [shape = 's32[1]{0}', space=sflag, size = 0x4, scoped, tag = 'scoped memory for tpu_custom_call.1']
    #allocation7 [shape = 'u8[16384]{0}', space=vmem, size = 0x4000, scoped, tag = 'output window, operand 0, single buffered']
    %7 = vsyncpa [#allocation3], 0
    %8 = vsyncpa [#allocation6], 0
    %9 = vsyncpa [#allocation4], 0
    // Predicated region
    $region2: #{tpu_custom_call.1} parent=1 // pred_check
      _
    $region3: #{tpu_custom_call.1} parent=1 // pred_check_branch
      %11 = sbr.rel (0) target = $region5
    $region4: #{tpu_custom_call.1} parent=1 // pred_region
      %s13 = ssub.s32 256, 256
      %14 = vsyncadd [#allocation3], %s13
      %s15 = sshll.u32 [#allocation2], 4
      %s16 = int_to_ptr.vmem [resolvable:$true] %s15
      %21 = dma.hbm_to_vmem [thread:$0]  %s0, 256, %s16, [#allocation3], 128, 128, 8
    $region5: #{tpu_custom_call.1} parent=1 // pred_fallthru
      _
    // Predicated region
    $region6: #{tpu_custom_call.1} parent=1 // pred_check
      _
    $region7: #{tpu_custom_call.1} parent=1 // pred_check_branch
      %23 = sbr.rel (0) target = $region9
    $region8: #{tpu_custom_call.1} parent=1 // pred_region
      %s25 = ssub.s32 4096, 4096
      %26 = vsyncadd [#allocation6], %s25
      %s27 = sshll.u32 [#allocation5], 4
      %s28 = int_to_ptr.vmem [resolvable:$true] %s27
      %33 = dma.hbm_to_vmem [thread:$0]  %s1, 4096, %s28, [#allocation6], 128, 128, 8
    $region9: #{tpu_custom_call.1} parent=1 // pred_fallthru
      _
    // Predicated region
    $region10: #{tpu_custom_call.1} parent=1 // pred_check
      _
    $region11: #{tpu_custom_call.1} parent=1 // pred_check_branch
      %35 = sbr.rel (0) target = $region13
    $region12: #{tpu_custom_call.1} parent=1 // pred_region
      %36 = dma.done [#allocation3], 256
    $region13: #{tpu_custom_call.1} parent=1 // pred_fallthru
      _
    // Predicated region
    $region14: #{tpu_custom_call.1} parent=1 // pred_check
      _
    $region15: #{tpu_custom_call.1} parent=1 // pred_check_branch
      %38 = sbr.rel (0) target = $region17
    $region16: #{tpu_custom_call.1} parent=1 // pred_region
      %39 = dma.done [#allocation6], 4096
    $region17: #{tpu_custom_call.1} parent=1 // pred_fallthru
      _
    %v40 = vld [vmem:[#allocation2] sm:$0xff]
    %v41 = vld [vmem:[#allocation2 + $0x8] sm:$0xff]
    %v42 = vld [vmem:[#allocation5] sm:$0xff]
    %v43 = vld [vmem:[#allocation5 + $0x8] sm:$0xff]
    %v44 = vld [vmem:[#allocation5 + $0x10] sm:$0xff]
    %v45 = vld [vmem:[#allocation5 + $0x18] sm:$0xff]
    %v46 = vld [vmem:[#allocation5 + $0x20] sm:$0xff]
    %v47 = vld [vmem:[#allocation5 + $0x28] sm:$0xff]
    %v48 = vld [vmem:[#allocation5 + $0x30] sm:$0xff]
    %v49 = vld [vmem:[#allocation5 + $0x38] sm:$0xff]
    %v50 = vld [vmem:[#allocation5 + $0x40] sm:$0xff]
    %v51 = vld [vmem:[#allocation5 + $0x48] sm:$0xff]
    %v52 = vld [vmem:[#allocation5 + $0x50] sm:$0xff]
    %v53 = vld [vmem:[#allocation5 + $0x58] sm:$0xff]
    %v54 = vld [vmem:[#allocation5 + $0x60] sm:$0xff]
    %v55 = vld [vmem:[#allocation5 + $0x68] sm:$0xff]
    %v56 = vld [vmem:[#allocation5 + $0x70] sm:$0xff]
    %v57 = vld [vmem:[#allocation5 + $0x78] sm:$0xff]
    %v58 = vld [vmem:[#allocation5 + $0x80] sm:$0xff]
    %v59 = vld [vmem:[#allocation5 + $0x88] sm:$0xff]
    %v60 = vld [vmem:[#allocation5 + $0x90] sm:$0xff]
    %v61 = vld [vmem:[#allocation5 + $0x98] sm:$0xff]
    %v62 = vld [vmem:[#allocation5 + $0xa0] sm:$0xff]
    %v63 = vld [vmem:[#allocation5 + $0xa8] sm:$0xff]
    %v64 = vld [vmem:[#allocation5 + $0xb0] sm:$0xff]
    %v65 = vld [vmem:[#allocation5 + $0xb8] sm:$0xff]
    %v66 = vld [vmem:[#allocation5 + $0xc0] sm:$0xff]
    %v67 = vld [vmem:[#allocation5 + $0xc8] sm:$0xff]
    %v68 = vld [vmem:[#allocation5 + $0xd0] sm:$0xff]
    %v69 = vld [vmem:[#allocation5 + $0xd8] sm:$0xff]
    %v70 = vld [vmem:[#allocation5 + $0xe0] sm:$0xff]
    %v71 = vld [vmem:[#allocation5 + $0xe8] sm:$0xff]
    %v72 = vld [vmem:[#allocation5 + $0xf0] sm:$0xff]
    %v73 = vld [vmem:[#allocation5 + $0xf8] sm:$0xff]
    %v76 = vunpack.c.l.b16 %v40
    %v77 = vunpack.c.h.b16 %v40
    %v78 = vunpack.c.l.b16 %v41
    %v79 = vunpack.c.h.b16 %v41
    %v80 = vpack.c.b16 %v78, %v76
    %v81 = vpack.c.b16 %v79, %v77
    %v116 = vunpack.c.l.b16 %v42
    %v117 = vunpack.c.h.b16 %v42
    %v118 = vunpack.c.l.b16 %v43
    %v119 = vunpack.c.h.b16 %v43
    %v120 = vunpack.c.l.b16 %v44
    %v121 = vunpack.c.h.b16 %v44
    %v122 = vunpack.c.l.b16 %v45
    %v123 = vunpack.c.h.b16 %v45
    %v124 = vunpack.c.l.b16 %v46
    %v125 = vunpack.c.h.b16 %v46
    %v126 = vunpack.c.l.b16 %v47
    %v127 = vunpack.c.h.b16 %v47
    %v128 = vunpack.c.l.b16 %v48
    %v129 = vunpack.c.h.b16 %v48
    %v130 = vunpack.c.l.b16 %v49
    %v131 = vunpack.c.h.b16 %v49
    %v132 = vunpack.c.l.b16 %v50
    %v133 = vunpack.c.h.b16 %v50
    %v134 = vunpack.c.l.b16 %v51
    %v135 = vunpack.c.h.b16 %v51
    %v136 = vunpack.c.l.b16 %v52
    %v137 = vunpack.c.h.b16 %v52
    %v138 = vunpack.c.l.b16 %v53
    %v139 = vunpack.c.h.b16 %v53
    %v140 = vunpack.c.l.b16 %v54
    %v141 = vunpack.c.h.b16 %v54
    %v142 = vunpack.c.l.b16 %v55
    %v143 = vunpack.c.h.b16 %v55
    %v144 = vunpack.c.l.b16 %v56
    %v145 = vunpack.c.h.b16 %v56
    %v146 = vunpack.c.l.b16 %v57
    %v147 = vunpack.c.h.b16 %v57
    %v148 = vunpack.c.l.b16 %v58
    %v149 = vunpack.c.h.b16 %v58
    %v150 = vunpack.c.l.b16 %v59
    %v151 = vunpack.c.h.b16 %v59
    %v152 = vunpack.c.l.b16 %v60
    %v153 = vunpack.c.h.b16 %v60
    %v154 = vunpack.c.l.b16 %v61
    %v155 = vunpack.c.h.b16 %v61
    %v156 = vunpack.c.l.b16 %v62
    %v157 = vunpack.c.h.b16 %v62
    %v158 = vunpack.c.l.b16 %v63
    %v159 = vunpack.c.h.b16 %v63
    %v160 = vunpack.c.l.b16 %v64
    %v161 = vunpack.c.h.b16 %v64
    %v162 = vunpack.c.l.b16 %v65
    %v163 = vunpack.c.h.b16 %v65
    %v164 = vunpack.c.l.b16 %v66
    %v165 = vunpack.c.h.b16 %v66
    %v166 = vunpack.c.l.b16 %v67
    %v167 = vunpack.c.h.b16 %v67
    %v168 = vunpack.c.l.b16 %v68
    %v169 = vunpack.c.h.b16 %v68
    %v170 = vunpack.c.l.b16 %v69
    %v171 = vunpack.c.h.b16 %v69
    %v172 = vunpack.c.l.b16 %v70
    %v173 = vunpack.c.h.b16 %v70
    %v174 = vunpack.c.l.b16 %v71
    %v175 = vunpack.c.h.b16 %v71
    %v176 = vunpack.c.l.b16 %v72
    %v177 = vunpack.c.h.b16 %v72
    %v178 = vunpack.c.l.b16 %v73
    %v179 = vunpack.c.h.b16 %v73
    %v180 = vpack.c.b16 %v118, %v116
    %v181 = vpack.c.b16 %v119, %v117
    %v182 = vpack.c.b16 %v122, %v120
    %v183 = vpack.c.b16 %v123, %v121
    %v184 = vpack.c.b16 %v126, %v124
    %v185 = vpack.c.b16 %v127, %v125
    %v186 = vpack.c.b16 %v130, %v128
    %v187 = vpack.c.b16 %v131, %v129
    %v188 = vpack.c.b16 %v134, %v132
    %v189 = vpack.c.b16 %v135, %v133
    %v190 = vpack.c.b16 %v138, %v136
    %v191 = vpack.c.b16 %v139, %v137
    %v192 = vpack.c.b16 %v142, %v140
    %v193 = vpack.c.b16 %v143, %v141
    %v194 = vpack.c.b16 %v146, %v144
    %v195 = vpack.c.b16 %v147, %v145
    %v196 = vpack.c.b16 %v150, %v148
    %v197 = vpack.c.b16 %v151, %v149
    %v198 = vpack.c.b16 %v154, %v152
    %v199 = vpack.c.b16 %v155, %v153
    %v200 = vpack.c.b16 %v158, %v156
    %v201 = vpack.c.b16 %v159, %v157
    %v202 = vpack.c.b16 %v162, %v160
    %v203 = vpack.c.b16 %v163, %v161
    %v204 = vpack.c.b16 %v166, %v164
    %v205 = vpack.c.b16 %v167, %v165
    %v206 = vpack.c.b16 %v170, %v168
    %v207 = vpack.c.b16 %v171, %v169
    %v208 = vpack.c.b16 %v174, %v172
    %v209 = vpack.c.b16 %v175, %v173
    %v210 = vpack.c.b16 %v178, %v176
    %v211 = vpack.c.b16 %v179, %v177
    %244 = vmatprep.subr.bf16.mxu0 %v195
    %245 = vmatpush1.bf16.msra.mxu0 %v194
    %246 = vmatprep.subr.bf16.mxu0 %v193
    %247 = vmatpush1.bf16.msra.mxu0 %v192
    %248 = vmatprep.subr.bf16.mxu0 %v191
    %249 = vmatpush1.bf16.msra.mxu0 %v190
    %250 = vmatprep.subr.bf16.mxu0 %v189
    %251 = vmatpush1.bf16.msra.mxu0 %v188
    %252 = vmatprep.subr.bf16.mxu0 %v187
    %253 = vmatpush1.bf16.msra.mxu0 %v186
    %254 = vmatprep.subr.bf16.mxu0 %v185
    %255 = vmatpush1.bf16.msra.mxu0 %v184
    %256 = vmatprep.subr.bf16.mxu0 %v183
    %257 = vmatpush1.bf16.msra.mxu0 %v182
    %258 = vmatprep.subr.bf16.mxu0 %v181
    %259 = vmatpush1.bf16.msra.mxu0 %v180
    %260 = vmatprep.subr.bf16.mxu0 %v211
    %261 = vmatpush2.bf16.msra.mxu0 %v210
    %262 = vmatprep.subr.bf16.mxu0 %v209
    %263 = vmatpush2.bf16.msra.mxu0 %v208
    %264 = vmatprep.subr.bf16.mxu0 %v207
    %265 = vmatpush2.bf16.msra.mxu0 %v206
    %266 = vmatprep.subr.bf16.mxu0 %v205
    %267 = vmatpush2.bf16.msra.mxu0 %v204
    %268 = vmatprep.subr.bf16.mxu0 %v203
    %269 = vmatpush2.bf16.msra.mxu0 %v202
    %270 = vmatprep.subr.bf16.mxu0 %v201
    %271 = vmatpush2.bf16.msra.mxu0 %v200
    %272 = vmatprep.subr.bf16.mxu0 %v199
    %273 = vmatpush2.bf16.msra.mxu0 %v198
    %274 = vmatprep.subr.bf16.mxu0 %v197
    %275 = vmatpush2.bf16.msra.mxu0 %v196
    %276 = vmatprep.mubr.bf16.mxu0 %v81
    %277 = vmatmul.mubr.bf16.gmra.mxu0 %v80
    %v278 = vpop.f32.mrf.mxu0
    %v279 = vadd.f32 0.0, %v278
    %v280 = vpop.f32.mrf.mxu0
    %v281 = vadd.f32 0.0, %v280
    %v282 = vpop.f32.mrf.mxu0
    %v283 = vadd.f32 0.0, %v282
    %v284 = vpop.f32.mrf.mxu0
    %v285 = vadd.f32 0.0, %v284
    %286 = vdwg.mxu0
    %287 = vst [vmem:[#allocation7] sm:$0xff] %v279
    %288 = vst [vmem:[#allocation7 + $0x8] sm:$0xff] %v281
    %289 = vst [vmem:[#allocation7 + $0x10] sm:$0xff] %v283
    %290 = vst [vmem:[#allocation7 + $0x18] sm:$0xff] %v285
    // Predicated region
    $region18: #{tpu_custom_call.1} parent=1 // pred_check
      _
    $region19: #{tpu_custom_call.1} parent=1 // pred_check_branch
      %292 = sbr.rel (0) target = $region21
    $region20: #{tpu_custom_call.1} parent=1 // pred_region
      %s294 = ssub.s32 512, 512
      %295 = vsyncadd [#allocation4], %s294
      %s296 = sshll.u32 [#allocation7], 4
      %s297 = int_to_ptr.vmem [resolvable:$true] %s296
      %302 = dma.vmem_to_hbm [thread:$0]  %s297, 512, %s2, [#allocation4], 256, 256, 16
    $region21: #{tpu_custom_call.1} parent=1 // pred_fallthru
      _
    // Predicated region
    $region22: #{tpu_custom_call.1} parent=1 // pred_check
      _
    $region23: #{tpu_custom_call.1} parent=1 // pred_check_branch
      %304 = sbr.rel (0) target = $region25
    $region24: #{tpu_custom_call.1} parent=1 // pred_region
      %305 = dma.done [#allocation4], 512
    $region25: #{tpu_custom_call.1} parent=1 // pred_fallthru
      _
    %306 = vsyncpa [#allocation3], 1
    %307 = vsyncpa [#allocation6], 1
    %308 = vsyncpa [#allocation4], 1

</llo_original>
